<compile_context>
chip_gen: v5e
topology: v5e:2x2
jax: 0.10.0
libtpu: 0.0.40
codegen_flags: <defaults>
</compile_context>

<pallas_src>
import jax
import jax.numpy as jnp
from jax.experimental import pallas as pl
from jax.experimental.pallas import tpu as pltpu

EPS = 1e-5


# ----------------------------- in-kernel helpers -----------------------------

def _affine_relu(y, s, b):
    # y: (C, HW); s/b: (C, 1) folded BN scale/bias (+ conv bias)
    return jnp.maximum(y * s + b, 0.0)


def _conv3x3(x, w9, mask_l, mask_r, W):
    """3x3 conv, stride 1, zero padding 1, on a (Cin, H*W) flattened image.

    w9: weights pre-reshaped in the wrapper to (Cout, 9*Cin), taps ordered
        (ky, kx, ci).  Returns (Cout, H*W) float32 via one im2col MXU matmul.
    """
    Cin, HW = x.shape
    pad = jnp.zeros((Cin, W + 1), x.dtype)
    xp = jnp.concatenate([pad, x, pad], axis=1)      # H-boundary zeros built in
    taps = []
    for dy in (-1, 0, 1):
        for dx in (-1, 0, 1):
            s = (1 + dy) * W + (1 + dx)
            t = xp[:, s:s + HW]                      # shift by dy rows, dx cols
            if dx == -1:
                t = t * mask_l                       # W-boundary (column) mask
            elif dx == 1:
                t = t * mask_r
            taps.append(t)
    patches = jnp.concatenate(taps, axis=0)          # (9*Cin, HW)
    return jnp.dot(w9, patches, preferred_element_type=jnp.float32)


# --------------------------------- kernel ------------------------------------

def _build_kernel(W):
    def kernel(x_ref,
               w1_ref, s1_ref, b1_ref,
               w2_ref, s2_ref, b2_ref,
               w3_ref, s3_ref, b3_ref,
               ml_ref, mr_ref,
               o_ref):
        x = x_ref[0]                                 # (Cin, HW), lane-dense
        ml = ml_ref[...]                             # (1, HW)
        mr = mr_ref[...]

        # conv1 (1x1) + BN + ReLU
        x1 = _affine_relu(
            jnp.dot(w1_ref[...], x, preferred_element_type=jnp.float32),
            s1_ref[...], b1_ref[...])

        # conv2 (3x3, Cin->Cout) + BN + ReLU
        x2 = _affine_relu(_conv3x3(x, w2_ref[...], ml, mr, W),
                          s2_ref[...], b2_ref[...])
        # conv3 (3x3, Cout->Cout); dropout is an eval-mode identity; BN + ReLU
        x2 = _affine_relu(_conv3x3(x2, w3_ref[...], ml, mr, W),
                          s3_ref[...], b3_ref[...])

        # x2 + cat(x, x1) over channels (cheap sublane concat) + final ReLU.
        x_concat = jnp.concatenate([x, x1], axis=0)  # (2*Cin = Cout, HW)
        o_ref[0] = jnp.maximum(x2 + x_concat, 0.0)   # lane-dense (Cout, 256) store
    return kernel


# --------------------------------- wrapper -----------------------------------

def _fold_bn(conv_bias, gamma, beta, mean, var):
    scale = gamma / jnp.sqrt(var + EPS)
    bias = beta + (conv_bias - mean) * scale
    return (scale.reshape(-1, 1).astype(jnp.float32),
            bias.reshape(-1, 1).astype(jnp.float32))


def enc_conv_block(x_nchw, p):
    """x_nchw: (N, Cin, H, W) float32 (PyTorch layout); p: dict of parameters."""
    N, Cin, H, W = x_nchw.shape
    Cout = p["w2"].shape[-1]
    assert Cout == 2 * Cin, "x2 + cat(x, x1) requires out_channels == 2*in_channels"
    HW = H * W

    # (N, C, H, W) -> (N, C, H*W): contiguous reshape, no transpose needed.
    x_flat = x_nchw.reshape(N, Cin, HW)

    # Fold BN (+ conv bias) into per-channel scale/bias, shaped (C, 1) for the
    # channels-on-sublanes layout.
    s1, b1 = _fold_bn(p["cb1"], p["g1"], p["be1"], p["m1"], p["v1"])
    s2, b2 = _fold_bn(p["cb2"], p["g2"], p["be2"], p["m2"], p["v2"])
    s3, b3 = _fold_bn(p["cb3"], p["g3"], p["be3"], p["m3"], p["v3"])

    # Pre-reshape weights in the wrapper (kernel does no weight slicing).
    w1k = jnp.transpose(p["w1"], (1, 0))                                # (Cin, Cin)  OI
    w2k = jnp.transpose(p["w2"], (3, 0, 1, 2)).reshape(Cout, 9 * Cin)   # (Cout, 9*Cin)
    w3k = jnp.transpose(p["w3"], (3, 0, 1, 2)).reshape(Cout, 9 * Cout)  # (Cout, 9*Cout)

    # Column-boundary masks for the 3x3 convs, precomputed in the wrapper.
    col = jnp.arange(HW, dtype=jnp.int32) % W
    mask_l = (col > 0).astype(jnp.float32).reshape(1, HW)      # valid for dx = -1
    mask_r = (col < W - 1).astype(jnp.float32).reshape(1, HW)  # valid for dx = +1

    params = [w1k, s1, b1, w2k, s2, b2, w3k, s3, b3, mask_l, mask_r]

    rep2d = lambda a: pl.BlockSpec(a.shape, lambda n: (0, 0))  # all params are 2D
    in_specs = [pl.BlockSpec((1, Cin, HW), lambda n: (n, 0, 0))]
    in_specs += [rep2d(a) for a in params]
    out_specs = pl.BlockSpec((1, Cout, HW), lambda n: (n, 0, 0))

    out_flat = pl.pallas_call(
        _build_kernel(W),
        out_shape=jax.ShapeDtypeStruct((N, Cout, HW), jnp.float32),
        grid=(N,),
        in_specs=in_specs,
        out_specs=out_specs,
        compiler_params=pltpu.CompilerParams(
            dimension_semantics=("parallel",)),
    )(x_flat, *params)

    return out_flat.reshape(N, Cout, H, W)


# ----------------------------- pure-JAX reference ----------------------------

def enc_conv_block_ref(x_nchw, p):
    dn = ("NCHW", "HWIO", "NCHW")

    def conv(x, w_hwio, b, pad):
        y = jax.lax.conv_general_dilated(x, w_hwio, (1, 1), pad,
                                         dimension_numbers=dn,
                                         precision=jax.lax.Precision.HIGHEST)
        return y + b.reshape(1, -1, 1, 1)

    def bn_relu(y, g, be, m, v):
        z = (y - m.reshape(1, -1, 1, 1)) / jnp.sqrt(v.reshape(1, -1, 1, 1) + EPS)
        return jnp.maximum(z * g.reshape(1, -1, 1, 1) + be.reshape(1, -1, 1, 1), 0.0)

    Cin = x_nchw.shape[1]
    w1 = p["w1"].reshape(1, 1, Cin, Cin)                  # (in, out) -> HWIO

    x1 = bn_relu(conv(x_nchw, w1, p["cb1"], [(0, 0), (0, 0)]),
                 p["g1"], p["be1"], p["m1"], p["v1"])
    x_concat = jnp.concatenate([x_nchw, x1], axis=1)
    x2 = bn_relu(conv(x_nchw, p["w2"], p["cb2"], [(1, 1), (1, 1)]),
                 p["g2"], p["be2"], p["m2"], p["v2"])
    x2 = conv(x2, p["w3"], p["cb3"], [(1, 1), (1, 1)])    # dropout: eval-mode identity
    x2 = bn_relu(x2, p["g3"], p["be3"], p["m3"], p["v3"])
    return jnp.maximum(x2 + x_concat, 0.0)


# -------------------------------- param init ---------------------------------

def make_params(key, cin, cout):
    ks = iter(jax.random.split(key, 32))
    p = {}

    def conv_w(shape):
        return (0.1 * jax.random.normal(next(ks), shape)).astype(jnp.float32)

    def vec(c, center=0.0, spread=0.1):
        return (center + spread * jax.random.normal(next(ks), (c,))).astype(jnp.float32)

    p["w1"] = conv_w((cin, cin))            # 1x1 conv, stored as (Cin_in, Cin_out)
    p["w2"] = conv_w((3, 3, cin, cout))     # HWIO
    p["w3"] = conv_w((3, 3, cout, cout))    # HWIO

    for i, c in zip((1, 2, 3), (cin, cout, cout)):
        p[f"cb{i}"] = vec(c)                               # conv bias
        p[f"g{i}"] = vec(c, center=1.0)                    # BN gamma
        p[f"be{i}"] = vec(c)                               # BN beta
        p[f"m{i}"] = vec(c)                                # BN running_mean
        p[f"v{i}"] = jnp.abs(vec(c, center=1.0)) + 0.5     # BN running_var
    return p


# ----------------------------------- main ------------------------------------

if __name__ == "__main__":
    N, Cin, H, W = 2, 4, 16, 16
    Cout = 2 * Cin                                         # required by x2 + cat(x, x1)

    key = jax.random.PRNGKey(0)
    kx, kp = jax.random.split(key)

    x_nchw = jax.random.normal(kx, (N, Cin, H, W), dtype=jnp.float32)  # PyTorch layout
    params = make_params(kp, Cin, Cout)

    out = jax.block_until_ready(enc_conv_block(x_nchw, params))
    ref = jax.block_until_ready(enc_conv_block_ref(x_nchw, params))

    assert out.shape == (N, Cout, H, W)
    # Kernel matmuls use default (bf16 MXU) precision per perf guidance; the
    # reference is full-f32, so allow a bf16-level tolerance.
    err = float(jnp.max(jnp.abs(out - ref) / (jnp.abs(ref) + 1.0)))
    assert err < 2e-2, f"mismatch vs reference: {err}"

    print("KERNEL_OK")
</pallas_src>

<mosaic_0001>
module attributes {stable_mosaic.version = 11 : i64} {
  func.func @kernel(%arg0: i32, %arg1: memref<1x4x256xf32, #tpu.memory_space<vmem>>, %arg2: memref<4x4xf32, #tpu.memory_space<vmem>>, %arg3: memref<4x1xf32, #tpu.memory_space<vmem>>, %arg4: memref<4x1xf32, #tpu.memory_space<vmem>>, %arg5: memref<8x36xf32, #tpu.memory_space<vmem>>, %arg6: memref<8x1xf32, #tpu.memory_space<vmem>>, %arg7: memref<8x1xf32, #tpu.memory_space<vmem>>, %arg8: memref<8x72xf32, #tpu.memory_space<vmem>>, %arg9: memref<8x1xf32, #tpu.memory_space<vmem>>, %arg10: memref<8x1xf32, #tpu.memory_space<vmem>>, %arg11: memref<1x256xf32, #tpu.memory_space<vmem>>, %arg12: memref<1x256xf32, #tpu.memory_space<vmem>>, %arg13: memref<1x8x256xf32, #tpu.memory_space<vmem>>) attributes {dimension_semantics = [#tpu.dimension_semantics<parallel>], iteration_bounds = array<i64: 2>, scalar_prefetch = 0 : i64, scratch_operands = 0 : i64, tpu.core_type = #tpu.core_type<tc>, window_params = [{transform_indices = @transform_0, window_bounds = array<i64: 1, 4, 256>}, {pipeline_mode = #tpu.pipeline_mode<synchronous>, transform_indices = @transform_1, window_bounds = array<i64: 4, 4>}, {pipeline_mode = #tpu.pipeline_mode<synchronous>, transform_indices = @transform_2, window_bounds = array<i64: 4, 1>}, {pipeline_mode = #tpu.pipeline_mode<synchronous>, transform_indices = @transform_3, window_bounds = array<i64: 4, 1>}, {pipeline_mode = #tpu.pipeline_mode<synchronous>, transform_indices = @transform_4, window_bounds = array<i64: 8, 36>}, {pipeline_mode = #tpu.pipeline_mode<synchronous>, transform_indices = @transform_5, window_bounds = array<i64: 8, 1>}, {pipeline_mode = #tpu.pipeline_mode<synchronous>, transform_indices = @transform_6, window_bounds = array<i64: 8, 1>}, {pipeline_mode = #tpu.pipeline_mode<synchronous>, transform_indices = @transform_7, window_bounds = array<i64: 8, 72>}, {pipeline_mode = #tpu.pipeline_mode<synchronous>, transform_indices = @transform_8, window_bounds = array<i64: 8, 1>}, {pipeline_mode = #tpu.pipeline_mode<synchronous>, transform_indices = @transform_9, window_bounds = array<i64: 8, 1>}, {pipeline_mode = #tpu.pipeline_mode<synchronous>, transform_indices = @transform_10, window_bounds = array<i64: 1, 256>}, {pipeline_mode = #tpu.pipeline_mode<synchronous>, transform_indices = @transform_11, window_bounds = array<i64: 1, 256>}, {transform_indices = @transform_12, window_bounds = array<i64: 1, 8, 256>}]} {
    %c0 = arith.constant 0 : index
    %c0_0 = arith.constant 0 : index
    %c0_1 = arith.constant 0 : index
    %0 = vector.load %arg1[%c0, %c0_0, %c0_1] : memref<1x4x256xf32, #tpu.memory_space<vmem>>, vector<1x4x256xf32>
    %1 = vector.shape_cast %0 : vector<1x4x256xf32> to vector<4x256xf32>
    %c0_2 = arith.constant 0 : index
    %c0_3 = arith.constant 0 : index
    %2 = vector.load %arg11[%c0_2, %c0_3] : memref<1x256xf32, #tpu.memory_space<vmem>>, vector<1x256xf32>
    %c0_4 = arith.constant 0 : index
    %c0_5 = arith.constant 0 : index
    %3 = vector.load %arg12[%c0_4, %c0_5] : memref<1x256xf32, #tpu.memory_space<vmem>>, vector<1x256xf32>
    %c0_6 = arith.constant 0 : index
    %c0_7 = arith.constant 0 : index
    %4 = vector.load %arg2[%c0_6, %c0_7] : memref<4x4xf32, #tpu.memory_space<vmem>>, vector<4x4xf32>
    %cst = arith.constant dense<0.000000e+00> : vector<4x256xf32>
    %5 = tpu.matmul %4, %1, %cst {dimension_numbers = #tpu.dot_dimension_numbers<[1], [0], [0], [1], [0, 0, 1, 1], [], []>} : vector<4x4xf32>, vector<4x256xf32>, vector<4x256xf32> -> vector<4x256xf32>
    %c0_8 = arith.constant 0 : index
    %c0_9 = arith.constant 0 : index
    %6 = vector.load %arg3[%c0_8, %c0_9] : memref<4x1xf32, #tpu.memory_space<vmem>>, vector<4x1xf32>
    %c0_10 = arith.constant 0 : index
    %c0_11 = arith.constant 0 : index
    %7 = vector.load %arg4[%c0_10, %c0_11] : memref<4x1xf32, #tpu.memory_space<vmem>>, vector<4x1xf32>
    %8 = vector.broadcast %6 : vector<4x1xf32> to vector<4x256xf32>
    %9 = arith.mulf %5, %8 : vector<4x256xf32>
    %10 = vector.broadcast %7 : vector<4x1xf32> to vector<4x256xf32>
    %11 = arith.addf %9, %10 : vector<4x256xf32>
    %cst_12 = arith.constant 0.000000e+00 : f32
    %12 = vector.broadcast %cst_12 : f32 to vector<4x256xf32>
    %13 = arith.maximumf %11, %12 : vector<4x256xf32>
    %c0_13 = arith.constant 0 : index
    %c0_14 = arith.constant 0 : index
    %14 = vector.load %arg5[%c0_13, %c0_14] : memref<8x36xf32, #tpu.memory_space<vmem>>, vector<8x36xf32>
    %cst_15 = arith.constant 0.000000e+00 : f32
    %15 = vector.broadcast %cst_15 : f32 to vector<4x17xf32>
    %16 = tpu.concatenate %15, %1, %15 in 1 : vector<4x17xf32>, vector<4x256xf32>, vector<4x17xf32> -> vector<4x290xf32>
    %17 = vector.extract_strided_slice %16 {offsets = [0, 0], sizes = [4, 256], strides = [1, 1]} : vector<4x290xf32> to vector<4x256xf32>
    %18 = vector.broadcast %2 : vector<1x256xf32> to vector<4x256xf32>
    %19 = arith.mulf %17, %18 : vector<4x256xf32>
    %20 = vector.extract_strided_slice %16 {offsets = [0, 1], sizes = [4, 256], strides = [1, 1]} : vector<4x290xf32> to vector<4x256xf32>
    %21 = vector.extract_strided_slice %16 {offsets = [0, 2], sizes = [4, 256], strides = [1, 1]} : vector<4x290xf32> to vector<4x256xf32>
    %22 = vector.broadcast %3 : vector<1x256xf32> to vector<4x256xf32>
    %23 = arith.mulf %21, %22 : vector<4x256xf32>
    %24 = vector.extract_strided_slice %16 {offsets = [0, 16], sizes = [4, 256], strides = [1, 1]} : vector<4x290xf32> to vector<4x256xf32>
    %25 = vector.broadcast %2 : vector<1x256xf32> to vector<4x256xf32>
    %26 = arith.mulf %24, %25 : vector<4x256xf32>
    %27 = vector.extract_strided_slice %16 {offsets = [0, 17], sizes = [4, 256], strides = [1, 1]} : vector<4x290xf32> to vector<4x256xf32>
    %28 = vector.extract_strided_slice %16 {offsets = [0, 18], sizes = [4, 256], strides = [1, 1]} : vector<4x290xf32> to vector<4x256xf32>
    %29 = vector.broadcast %3 : vector<1x256xf32> to vector<4x256xf32>
    %30 = arith.mulf %28, %29 : vector<4x256xf32>
    %31 = vector.extract_strided_slice %16 {offsets = [0, 32], sizes = [4, 256], strides = [1, 1]} : vector<4x290xf32> to vector<4x256xf32>
    %32 = vector.broadcast %2 : vector<1x256xf32> to vector<4x256xf32>
    %33 = arith.mulf %31, %32 : vector<4x256xf32>
    %34 = vector.extract_strided_slice %16 {offsets = [0, 33], sizes = [4, 256], strides = [1, 1]} : vector<4x290xf32> to vector<4x256xf32>
    %35 = vector.extract_strided_slice %16 {offsets = [0, 34], sizes = [4, 256], strides = [1, 1]} : vector<4x290xf32> to vector<4x256xf32>
    %36 = vector.broadcast %3 : vector<1x256xf32> to vector<4x256xf32>
    %37 = arith.mulf %35, %36 : vector<4x256xf32>
    %38 = tpu.concatenate %19, %20, %23, %26, %27, %30, %33, %34, %37 in 0 : vector<4x256xf32>, vector<4x256xf32>, vector<4x256xf32>, vector<4x256xf32>, vector<4x256xf32>, vector<4x256xf32>, vector<4x256xf32>, vector<4x256xf32>, vector<4x256xf32> -> vector<36x256xf32>
    %cst_16 = arith.constant dense<0.000000e+00> : vector<8x256xf32>
    %39 = tpu.matmul %14, %38, %cst_16 {dimension_numbers = #tpu.dot_dimension_numbers<[1], [0], [0], [1], [0, 0, 1, 1], [], []>} : vector<8x36xf32>, vector<36x256xf32>, vector<8x256xf32> -> vector<8x256xf32>
    %c0_17 = arith.constant 0 : index
    %c0_18 = arith.constant 0 : index
    %40 = vector.load %arg6[%c0_17, %c0_18] : memref<8x1xf32, #tpu.memory_space<vmem>>, vector<8x1xf32>
    %c0_19 = arith.constant 0 : index
    %c0_20 = arith.constant 0 : index
    %41 = vector.load %arg7[%c0_19, %c0_20] : memref<8x1xf32, #tpu.memory_space<vmem>>, vector<8x1xf32>
    %42 = vector.broadcast %40 : vector<8x1xf32> to vector<8x256xf32>
    %43 = arith.mulf %39, %42 : vector<8x256xf32>
    %44 = vector.broadcast %41 : vector<8x1xf32> to vector<8x256xf32>
    %45 = arith.addf %43, %44 : vector<8x256xf32>
    %cst_21 = arith.constant 0.000000e+00 : f32
    %46 = vector.broadcast %cst_21 : f32 to vector<8x256xf32>
    %47 = arith.maximumf %45, %46 : vector<8x256xf32>
    %c0_22 = arith.constant 0 : index
    %c0_23 = arith.constant 0 : index
    %48 = vector.load %arg8[%c0_22, %c0_23] : memref<8x72xf32, #tpu.memory_space<vmem>>, vector<8x72xf32>
    %cst_24 = arith.constant 0.000000e+00 : f32
    %49 = vector.broadcast %cst_24 : f32 to vector<8x17xf32>
    %50 = tpu.concatenate %49, %47, %49 in 1 : vector<8x17xf32>, vector<8x256xf32>, vector<8x17xf32> -> vector<8x290xf32>
    %51 = vector.extract_strided_slice %50 {offsets = [0, 0], sizes = [8, 256], strides = [1, 1]} : vector<8x290xf32> to vector<8x256xf32>
    %52 = vector.broadcast %2 : vector<1x256xf32> to vector<8x256xf32>
    %53 = arith.mulf %51, %52 : vector<8x256xf32>
    %54 = vector.extract_strided_slice %50 {offsets = [0, 1], sizes = [8, 256], strides = [1, 1]} : vector<8x290xf32> to vector<8x256xf32>
    %55 = vector.extract_strided_slice %50 {offsets = [0, 2], sizes = [8, 256], strides = [1, 1]} : vector<8x290xf32> to vector<8x256xf32>
    %56 = vector.broadcast %3 : vector<1x256xf32> to vector<8x256xf32>
    %57 = arith.mulf %55, %56 : vector<8x256xf32>
    %58 = vector.extract_strided_slice %50 {offsets = [0, 16], sizes = [8, 256], strides = [1, 1]} : vector<8x290xf32> to vector<8x256xf32>
    %59 = vector.broadcast %2 : vector<1x256xf32> to vector<8x256xf32>
    %60 = arith.mulf %58, %59 : vector<8x256xf32>
    %61 = vector.extract_strided_slice %50 {offsets = [0, 17], sizes = [8, 256], strides = [1, 1]} : vector<8x290xf32> to vector<8x256xf32>
    %62 = vector.extract_strided_slice %50 {offsets = [0, 18], sizes = [8, 256], strides = [1, 1]} : vector<8x290xf32> to vector<8x256xf32>
    %63 = vector.broadcast %3 : vector<1x256xf32> to vector<8x256xf32>
    %64 = arith.mulf %62, %63 : vector<8x256xf32>
    %65 = vector.extract_strided_slice %50 {offsets = [0, 32], sizes = [8, 256], strides = [1, 1]} : vector<8x290xf32> to vector<8x256xf32>
    %66 = vector.broadcast %2 : vector<1x256xf32> to vector<8x256xf32>
    %67 = arith.mulf %65, %66 : vector<8x256xf32>
    %68 = vector.extract_strided_slice %50 {offsets = [0, 33], sizes = [8, 256], strides = [1, 1]} : vector<8x290xf32> to vector<8x256xf32>
    %69 = vector.extract_strided_slice %50 {offsets = [0, 34], sizes = [8, 256], strides = [1, 1]} : vector<8x290xf32> to vector<8x256xf32>
    %70 = vector.broadcast %3 : vector<1x256xf32> to vector<8x256xf32>
    %71 = arith.mulf %69, %70 : vector<8x256xf32>
    %72 = tpu.concatenate %53, %54, %57, %60, %61, %64, %67, %68, %71 in 0 : vector<8x256xf32>, vector<8x256xf32>, vector<8x256xf32>, vector<8x256xf32>, vector<8x256xf32>, vector<8x256xf32>, vector<8x256xf32>, vector<8x256xf32>, vector<8x256xf32> -> vector<72x256xf32>
    %cst_25 = arith.constant dense<0.000000e+00> : vector<8x256xf32>
    %73 = tpu.matmul %48, %72, %cst_25 {dimension_numbers = #tpu.dot_dimension_numbers<[1], [0], [0], [1], [0, 0, 1, 1], [], []>} : vector<8x72xf32>, vector<72x256xf32>, vector<8x256xf32> -> vector<8x256xf32>
    %c0_26 = arith.constant 0 : index
    %c0_27 = arith.constant 0 : index
    %74 = vector.load %arg9[%c0_26, %c0_27] : memref<8x1xf32, #tpu.memory_space<vmem>>, vector<8x1xf32>
    %c0_28 = arith.constant 0 : index
    %c0_29 = arith.constant 0 : index
    %75 = vector.load %arg10[%c0_28, %c0_29] : memref<8x1xf32, #tpu.memory_space<vmem>>, vector<8x1xf32>
    %76 = vector.broadcast %74 : vector<8x1xf32> to vector<8x256xf32>
    %77 = arith.mulf %73, %76 : vector<8x256xf32>
    %78 = vector.broadcast %75 : vector<8x1xf32> to vector<8x256xf32>
    %79 = arith.addf %77, %78 : vector<8x256xf32>
    %cst_30 = arith.constant 0.000000e+00 : f32
    %80 = vector.broadcast %cst_30 : f32 to vector<8x256xf32>
    %81 = arith.maximumf %79, %80 : vector<8x256xf32>
    %82 = tpu.concatenate %1, %13 in 0 : vector<4x256xf32>, vector<4x256xf32> -> vector<8x256xf32>
    %83 = arith.addf %81, %82 : vector<8x256xf32>
    %cst_31 = arith.constant 0.000000e+00 : f32
    %84 = vector.broadcast %cst_31 : f32 to vector<8x256xf32>
    %85 = arith.maximumf %83, %84 : vector<8x256xf32>
    %c0_32 = arith.constant 0 : index
    %c0_33 = arith.constant 0 : index
    %c0_34 = arith.constant 0 : index
    %86 = vector.load %arg13[%c0_32, %c0_33, %c0_34] : memref<1x8x256xf32, #tpu.memory_space<vmem>>, vector<1x8x256xf32>
    %87 = vector.shape_cast %86 : vector<1x8x256xf32> to vector<8x256xf32>
    %88 = vector.shape_cast %85 : vector<8x256xf32> to vector<1x8x256xf32>
    tpu.vector_store %arg13[%c0_32, %c0_33, %c0_34], %88 {strides = array<i32>} : memref<1x8x256xf32, #tpu.memory_space<vmem>>, vector<1x8x256xf32>,
    return
  }
  func.func @transform_0(%arg0: i32) -> (i32, i32, i32) {
    %c0_i32 = arith.constant 0 : i32
    %c0_i32_0 = arith.constant 0 : i32
    %c0_i32_1 = arith.constant 0 : i32
    return %arg0, %c0_i32, %c0_i32_0 : i32, i32, i32
  }
  func.func @transform_1(%arg0: i32) -> (i32, i32) {
    %c0_i32 = arith.constant 0 : i32
    %c0_i32_0 = arith.constant 0 : i32
    %c0_i32_1 = arith.constant 0 : i32
    return %c0_i32, %c0_i32_0 : i32, i32
  }
  func.func @transform_2(%arg0: i32) -> (i32, i32) {
    %c0_i32 = arith.constant 0 : i32
    %c0_i32_0 = arith.constant 0 : i32
    %c0_i32_1 = arith.constant 0 : i32
    return %c0_i32, %c0_i32_0 : i32, i32
  }
  func.func @transform_3(%arg0: i32) -> (i32, i32) {
    %c0_i32 = arith.constant 0 : i32
    %c0_i32_0 = arith.constant 0 : i32
    %c0_i32_1 = arith.constant 0 : i32
    return %c0_i32, %c0_i32_0 : i32, i32
  }
  func.func @transform_4(%arg0: i32) -> (i32, i32) {
    %c0_i32 = arith.constant 0 : i32
    %c0_i32_0 = arith.constant 0 : i32
    %c0_i32_1 = arith.constant 0 : i32
    return %c0_i32, %c0_i32_0 : i32, i32
  }
  func.func @transform_5(%arg0: i32) -> (i32, i32) {
    %c0_i32 = arith.constant 0 : i32
    %c0_i32_0 = arith.constant 0 : i32
    %c0_i32_1 = arith.constant 0 : i32
    return %c0_i32, %c0_i32_0 : i32, i32
  }
  func.func @transform_6(%arg0: i32) -> (i32, i32) {
    %c0_i32 = arith.constant 0 : i32
    %c0_i32_0 = arith.constant 0 : i32
    %c0_i32_1 = arith.constant 0 : i32
    return %c0_i32, %c0_i32_0 : i32, i32
  }
  func.func @transform_7(%arg0: i32) -> (i32, i32) {
    %c0_i32 = arith.constant 0 : i32
    %c0_i32_0 = arith.constant 0 : i32
    %c0_i32_1 = arith.constant 0 : i32
    return %c0_i32, %c0_i32_0 : i32, i32
  }
  func.func @transform_8(%arg0: i32) -> (i32, i32) {
    %c0_i32 = arith.constant 0 : i32
    %c0_i32_0 = arith.constant 0 : i32
    %c0_i32_1 = arith.constant 0 : i32
    return %c0_i32, %c0_i32_0 : i32, i32
  }
  func.func @transform_9(%arg0: i32) -> (i32, i32) {
    %c0_i32 = arith.constant 0 : i32
    %c0_i32_0 = arith.constant 0 : i32
    %c0_i32_1 = arith.constant 0 : i32
    return %c0_i32, %c0_i32_0 : i32, i32
  }
  func.func @transform_10(%arg0: i32) -> (i32, i32) {
    %c0_i32 = arith.constant 0 : i32
    %c0_i32_0 = arith.constant 0 : i32
    %c0_i32_1 = arith.constant 0 : i32
    return %c0_i32, %c0_i32_0 : i32, i32
  }
  func.func @transform_11(%arg0: i32) -> (i32, i32) {
    %c0_i32 = arith.constant 0 : i32
    %c0_i32_0 = arith.constant 0 : i32
    %c0_i32_1 = arith.constant 0 : i32
    return %c0_i32, %c0_i32_0 : i32, i32
  }
  func.func @transform_12(%arg0: i32) -> (i32, i32, i32) {
    %c0_i32 = arith.constant 0 : i32
    %c0_i32_0 = arith.constant 0 : i32
    %c0_i32_1 = arith.constant 0 : i32
    return %arg0, %c0_i32, %c0_i32_0 : i32, i32, i32
  }
}

</mosaic_0001>

<llo_original>
// kernel: tpu_custom_call.1
$region0: #{tpu_custom_call.1}
  #allocation0 [shape = 'u32[]', space=smem, size = 0x4, offset = 0x4, fixed_abs, tag = 'smem constant byte address 0x4 - core index']
  #allocation1 [shape = 'u32[72,128]{1,0:T(1,128)}', space=vmem, size = 0x9000, scoped, tag = 'internal scratch']
  %s0 = inlined_call_operand.vmem [shape: f32[2,4,256], index: 0, kind: input, shape index: {}]
  %s1 = inlined_call_operand.vmem [shape: f32[4,4], index: 1, kind: input, shape index: {}]
  %s2 = inlined_call_operand.vmem [shape: f32[4,1], index: 2, kind: input, shape index: {}]
  %s3 = inlined_call_operand.vmem [shape: f32[4,1], index: 3, kind: input, shape index: {}]
  %s4 = inlined_call_operand.vmem [shape: f32[8,36], index: 4, kind: input, shape index: {}]
  %s5 = inlined_call_operand.vmem [shape: f32[8,1], index: 5, kind: input, shape index: {}]
  %s6 = inlined_call_operand.vmem [shape: f32[8,1], index: 6, kind: input, shape index: {}]
  %s7 = inlined_call_operand.vmem [shape: f32[8,72], index: 7, kind: input, shape index: {}]
  %s8 = inlined_call_operand.vmem [shape: f32[8,1], index: 8, kind: input, shape index: {}]
  %s9 = inlined_call_operand.vmem [shape: f32[8,1], index: 9, kind: input, shape index: {}]
  %s10 = inlined_call_operand.vmem [shape: f32[1,256], index: 10, kind: input, shape index: {}]
  %s11 = inlined_call_operand.vmem [shape: f32[1,256], index: 11, kind: input, shape index: {}]
  %s12 = inlined_call_operand.hbm [shape: f32[2,8,256], index: 12, kind: output, shape index: {}]
  %s13 = sld [smem:[#allocation0]]
  $region81: #{tpu_custom_call.1} parent=0
    _
  %s15 = ssub.s32 1, %s13
  %s16 = scalar_select 0, %s15, %s13
  $region1: #{tpu_custom_call.1} parent=0
    #allocation2 [shape = 'u8[16384]{0}', space=vmem, size = 0x4000, scoped, tag = 'output window, operand 0']
    #allocation3 [shape = 's32[2]{0}', space=sflag, size = 0x8, scoped, tag = 'scoped memory for tpu_custom_call.1']
    %17 = vsyncpa [#allocation3], 0
    %s18 = scalar_lea.sflag [#allocation3], 1
    %19 = vsyncpa %s18, 0
    loop: start=0, step=1, limit=4
    $region2: #{tpu_custom_call.1} parent=1 // loop_pre_header
      _
    $region3: #{tpu_custom_call.1} parent=1 // loop_header
      %s21 = sphi 0, %s25
      %p22 = scmp.ge.s32.totalorder %s21, 4
      %s31 = sphi 0, %s33
      %s34 = sphi 0, %s31
      %s35 = sphi 0, %s34
      %s51 = sphi 0, %s35
      %s55 = sphi 0, %s55
      %s57 = sphi 0, %s55
      %s58 = sphi 0, %s57
      %s72 = sphi 0, %s58
      %s76 = sphi 0, %s76
      %s78 = sphi 0, %s76
      %s79 = sphi 0, %s78
      %s93 = sphi 0, %s79
      %s97 = sphi 0, %s97
      %s99 = sphi 0, %s97
      %s100 = sphi 0, %s99
      %s114 = sphi 0, %s100
      %s118 = sphi 0, %s118
      %s120 = sphi 0, %s118
      %s121 = sphi 0, %s120
      %s135 = sphi 0, %s121
      %s139 = sphi 0, %s139
      %s141 = sphi 0, %s139
      %s142 = sphi 0, %s141
      %s156 = sphi 0, %s142
      %s160 = sphi 0, %s160
      %s162 = sphi 0, %s160
      %s163 = sphi 0, %s162
      %s177 = sphi 0, %s163
      %s181 = sphi 0, %s181
      %s183 = sphi 0, %s181
      %s184 = sphi 0, %s183
      %s198 = sphi 0, %s184
      %s202 = sphi 0, %s202
      %s204 = sphi 0, %s202
      %s205 = sphi 0, %s204
      %s219 = sphi 0, %s205
      %s223 = sphi 0, %s223
      %s225 = sphi 0, %s223
      %s226 = sphi 0, %s225
      %s240 = sphi 0, %s226
      %s244 = sphi 0, %s244
      %s246 = sphi 0, %s244
      %s247 = sphi 0, %s246
      %s261 = sphi 0, %s247
      %s265 = sphi 0, %s265
      %s267 = sphi 0, %s265
      %s268 = sphi 0, %s267
      %s282 = sphi 0, %s268
      %s288 = sphi 0, %s290
      %s291 = sphi 0, %s288
      %s292 = sphi 0, %s291
      %s308 = sphi 0, %s292
    $region4: #{tpu_custom_call.1} parent=1 // loop_header_branch
      %24 = sbr.rel (%p22) target = $region8
    $region5: #{tpu_custom_call.1} parent=1 // loop_body
      %s26 = ssub.s32 %s21, 1
      %s27 = ssub.s32 %s21, 2
      %s28 = sadd.s32 %s21, 1
      %s29 = ssub.s32 %s21, %s28
      %p30 = scmp.eq.s32.totalorder %s29, 0
      %s32 = sadd.s32 %s31, 1
      %s33 = scalar_select %p30, %s31, %s32
      %p36 = pneg %p30
      %p37 = scmp.eq.s32.totalorder %s21, 1
      %p38 = por %p36, %p37
      %p39 = scmp.ne.s32.totalorder %s31, %s34
      %p40 = scmp.eq.s32.totalorder %s21, 0
      %p41 = por %p39, %p40
      %p42 = scmp.ne.s32.totalorder %s31, %s34
      %p43 = scmp.eq.s32.totalorder %s26, 1
      %p44 = por %p42, %p43
      %p45 = scmp.ne.s32.totalorder %s34, %s35
      %p46 = scmp.eq.s32.totalorder %s26, 0
      %p47 = por %p45, %p46
      %p48 = scmp.ne.s32.totalorder %s34, %s35
      %p49 = scmp.eq.s32.totalorder %s27, 1
      %p50 = por %p48, %p49
      %p52 = scmp.ne.s32.totalorder %s35, %s51
      %p53 = scmp.eq.s32.totalorder %s27, 0
      %p54 = por %p52, %p53
      %s56 = sadd.s32 %s55, 1
      %p59 = scmp.eq.s32.totalorder %s21, 1
      %p60 = scmp.ne.s32.totalorder %s55, %s57
      %p61 = scmp.eq.s32.totalorder %s21, 0
      %p62 = por %p60, %p61
      %p63 = scmp.ne.s32.totalorder %s55, %s57
      %p64 = scmp.eq.s32.totalorder %s26, 1
      %p65 = por %p63, %p64
      %p66 = scmp.ne.s32.totalorder %s57, %s58
      %p67 = scmp.eq.s32.totalorder %s26, 0
      %p68 = por %p66, %p67
      %p69 = scmp.ne.s32.totalorder %s57, %s58
      %p70 = scmp.eq.s32.totalorder %s27, 1
      %p71 = por %p69, %p70
      %p73 = scmp.ne.s32.totalorder %s58, %s72
      %p74 = scmp.eq.s32.totalorder %s27, 0
      %p75 = por %p73, %p74
      %s77 = sadd.s32 %s76, 1
      %p80 = scmp.eq.s32.totalorder %s21, 1
      %p81 = scmp.ne.s32.totalorder %s76, %s78
      %p82 = scmp.eq.s32.totalorder %s21, 0
      %p83 = por %p81, %p82
      %p84 = scmp.ne.s32.totalorder %s76, %s78
      %p85 = scmp.eq.s32.totalorder %s26, 1
      %p86 = por %p84, %p85
      %p87 = scmp.ne.s32.totalorder %s78, %s79
      %p88 = scmp.eq.s32.totalorder %s26, 0
      %p89 = por %p87, %p88
      %p90 = scmp.ne.s32.totalorder %s78, %s79
      %p91 = scmp.eq.s32.totalorder %s27, 1
      %p92 = por %p90, %p91
      %p94 = scmp.ne.s32.totalorder %s79, %s93
      %p95 = scmp.eq.s32.totalorder %s27, 0
      %p96 = por %p94, %p95
      %s98 = sadd.s32 %s97, 1
      %p101 = scmp.eq.s32.totalorder %s21, 1
      %p102 = scmp.ne.s32.totalorder %s97, %s99
      %p103 = scmp.eq.s32.totalorder %s21, 0
      %p104 = por %p102, %p103
      %p105 = scmp.ne.s32.totalorder %s97, %s99
      %p106 = scmp.eq.s32.totalorder %s26, 1
      %p107 = por %p105, %p106
      %p108 = scmp.ne.s32.totalorder %s99, %s100
      %p109 = scmp.eq.s32.totalorder %s26, 0
      %p110 = por %p108, %p109
      %p111 = scmp.ne.s32.totalorder %s99, %s100
      %p112 = scmp.eq.s32.totalorder %s27, 1
      %p113 = por %p111, %p112
      %p115 = scmp.ne.s32.totalorder %s100, %s114
      %p116 = scmp.eq.s32.totalorder %s27, 0
      %p117 = por %p115, %p116
      %s119 = sadd.s32 %s118, 1
      %p122 = scmp.eq.s32.totalorder %s21, 1
      %p123 = scmp.ne.s32.totalorder %s118, %s120
      %p124 = scmp.eq.s32.totalorder %s21, 0
      %p125 = por %p123, %p124
      %p126 = scmp.ne.s32.totalorder %s118, %s120
      %p127 = scmp.eq.s32.totalorder %s26, 1
      %p128 = por %p126, %p127
      %p129 = scmp.ne.s32.totalorder %s120, %s121
      %p130 = scmp.eq.s32.totalorder %s26, 0
      %p131 = por %p129, %p130
      %p132 = scmp.ne.s32.totalorder %s120, %s121
      %p133 = scmp.eq.s32.totalorder %s27, 1
      %p134 = por %p132, %p133
      %p136 = scmp.ne.s32.totalorder %s121, %s135
      %p137 = scmp.eq.s32.totalorder %s27, 0
      %p138 = por %p136, %p137
      %s140 = sadd.s32 %s139, 1
      %p143 = scmp.eq.s32.totalorder %s21, 1
      %p144 = scmp.ne.s32.totalorder %s139, %s141
      %p145 = scmp.eq.s32.totalorder %s21, 0
      %p146 = por %p144, %p145
      %p147 = scmp.ne.s32.totalorder %s139, %s141
      %p148 = scmp.eq.s32.totalorder %s26, 1
      %p149 = por %p147, %p148
      %p150 = scmp.ne.s32.totalorder %s141, %s142
      %p151 = scmp.eq.s32.totalorder %s26, 0
      %p152 = por %p150, %p151
      %p153 = scmp.ne.s32.totalorder %s141, %s142
      %p154 = scmp.eq.s32.totalorder %s27, 1
      %p155 = por %p153, %p154
      %p157 = scmp.ne.s32.totalorder %s142, %s156
      %p158 = scmp.eq.s32.totalorder %s27, 0
      %p159 = por %p157, %p158
      %s161 = sadd.s32 %s160, 1
      %p164 = scmp.eq.s32.totalorder %s21, 1
      %p165 = scmp.ne.s32.totalorder %s160, %s162
      %p166 = scmp.eq.s32.totalorder %s21, 0
      %p167 = por %p165, %p166
      %p168 = scmp.ne.s32.totalorder %s160, %s162
      %p169 = scmp.eq.s32.totalorder %s26, 1
      %p170 = por %p168, %p169
      %p171 = scmp.ne.s32.totalorder %s162, %s163
      %p172 = scmp.eq.s32.totalorder %s26, 0
      %p173 = por %p171, %p172
      %p174 = scmp.ne.s32.totalorder %s162, %s163
      %p175 = scmp.eq.s32.totalorder %s27, 1
      %p176 = por %p174, %p175
      %p178 = scmp.ne.s32.totalorder %s163, %s177
      %p179 = scmp.eq.s32.totalorder %s27, 0
      %p180 = por %p178, %p179
      %s182 = sadd.s32 %s181, 1
      %p185 = scmp.eq.s32.totalorder %s21, 1
      %p186 = scmp.ne.s32.totalorder %s181, %s183
      %p187 = scmp.eq.s32.totalorder %s21, 0
      %p188 = por %p186, %p187
      %p189 = scmp.ne.s32.totalorder %s181, %s183
      %p190 = scmp.eq.s32.totalorder %s26, 1
      %p191 = por %p189, %p190
      %p192 = scmp.ne.s32.totalorder %s183, %s184
      %p193 = scmp.eq.s32.totalorder %s26, 0
      %p194 = por %p192, %p193
      %p195 = scmp.ne.s32.totalorder %s183, %s184
      %p196 = scmp.eq.s32.totalorder %s27, 1
      %p197 = por %p195, %p196
      %p199 = scmp.ne.s32.totalorder %s184, %s198
      %p200 = scmp.eq.s32.totalorder %s27, 0
      %p201 = por %p199, %p200
      %s203 = sadd.s32 %s202, 1
      %p206 = scmp.eq.s32.totalorder %s21, 1
      %p207 = scmp.ne.s32.totalorder %s202, %s204
      %p208 = scmp.eq.s32.totalorder %s21, 0
      %p209 = por %p207, %p208
      %p210 = scmp.ne.s32.totalorder %s202, %s204
      %p211 = scmp.eq.s32.totalorder %s26, 1
      %p212 = por %p210, %p211
      %p213 = scmp.ne.s32.totalorder %s204, %s205
      %p214 = scmp.eq.s32.totalorder %s26, 0
      %p215 = por %p213, %p214
      %p216 = scmp.ne.s32.totalorder %s204, %s205
      %p217 = scmp.eq.s32.totalorder %s27, 1
      %p218 = por %p216, %p217
      %p220 = scmp.ne.s32.totalorder %s205, %s219
      %p221 = scmp.eq.s32.totalorder %s27, 0
      %p222 = por %p220, %p221
      %s224 = sadd.s32 %s223, 1
      %p227 = scmp.eq.s32.totalorder %s21, 1
      %p228 = scmp.ne.s32.totalorder %s223, %s225
      %p229 = scmp.eq.s32.totalorder %s21, 0
      %p230 = por %p228, %p229
      %p231 = scmp.ne.s32.totalorder %s223, %s225
      %p232 = scmp.eq.s32.totalorder %s26, 1
      %p233 = por %p231, %p232
      %p234 = scmp.ne.s32.totalorder %s225, %s226
      %p235 = scmp.eq.s32.totalorder %s26, 0
      %p236 = por %p234, %p235
      %p237 = scmp.ne.s32.totalorder %s225, %s226
      %p238 = scmp.eq.s32.totalorder %s27, 1
      %p239 = por %p237, %p238
      %p241 = scmp.ne.s32.totalorder %s226, %s240
      %p242 = scmp.eq.s32.totalorder %s27, 0
      %p243 = por %p241, %p242
      %s245 = sadd.s32 %s244, 1
      %p248 = scmp.eq.s32.totalorder %s21, 1
      %p249 = scmp.ne.s32.totalorder %s244, %s246
      %p250 = scmp.eq.s32.totalorder %s21, 0
      %p251 = por %p249, %p250
      %p252 = scmp.ne.s32.totalorder %s244, %s246
      %p253 = scmp.eq.s32.totalorder %s26, 1
      %p254 = por %p252, %p253
      %p255 = scmp.ne.s32.totalorder %s246, %s247
      %p256 = scmp.eq.s32.totalorder %s26, 0
      %p257 = por %p255, %p256
      %p258 = scmp.ne.s32.totalorder %s246, %s247
      %p259 = scmp.eq.s32.totalorder %s27, 1
      %p260 = por %p258, %p259
      %p262 = scmp.ne.s32.totalorder %s247, %s261
      %p263 = scmp.eq.s32.totalorder %s27, 0
      %p264 = por %p262, %p263
      %s266 = sadd.s32 %s265, 1
      %p269 = scmp.eq.s32.totalorder %s21, 1
      %p270 = scmp.ne.s32.totalorder %s265, %s267
      %p271 = scmp.eq.s32.totalorder %s21, 0
      %p272 = por %p270, %p271
      %p273 = scmp.ne.s32.totalorder %s265, %s267
      %p274 = scmp.eq.s32.totalorder %s26, 1
      %p275 = por %p273, %p274
      %p276 = scmp.ne.s32.totalorder %s267, %s268
      %p277 = scmp.eq.s32.totalorder %s26, 0
      %p278 = por %p276, %p277
      %p279 = scmp.ne.s32.totalorder %s267, %s268
      %p280 = scmp.eq.s32.totalorder %s27, 1
      %p281 = por %p279, %p280
      %p283 = scmp.ne.s32.totalorder %s268, %s282
      %p284 = scmp.eq.s32.totalorder %s27, 0
      %p285 = por %p283, %p284
      %s286 = ssub.s32 %s21, %s28
      %p287 = scmp.eq.s32.totalorder %s286, 0
      %s289 = sadd.s32 %s288, 1
      %s290 = scalar_select %p287, %s288, %s289
      %p293 = pneg %p287
      %p294 = scmp.eq.s32.totalorder %s21, 1
      %p295 = por %p293, %p294
      %p296 = scmp.ne.s32.totalorder %s288, %s291
      %p297 = scmp.eq.s32.totalorder %s21, 0
      %p298 = por %p296, %p297
      %p299 = scmp.ne.s32.totalorder %s288, %s291
      %p300 = scmp.eq.s32.totalorder %s26, 1
      %p301 = por %p299, %p300
      %p302 = scmp.ne.s32.totalorder %s291, %s292
      %p303 = scmp.eq.s32.totalorder %s26, 0
      %p304 = por %p302, %p303
      %p305 = scmp.ne.s32.totalorder %s291, %s292
      %p306 = scmp.eq.s32.totalorder %s27, 1
      %p307 = por %p305, %p306
      %p309 = scmp.ne.s32.totalorder %s292, %s308
      %p310 = scmp.eq.s32.totalorder %s27, 0
      %p311 = por %p309, %p310
      %p312 = scmp.le.s32.totalorder 1, %s21
      %p313 = scmp.lt.s32.totalorder %s21, 3
      %p314 = pnand %p312, %p313
      %p315 = pneg %p314
      // Predicated region
      $region9: #{tpu_custom_call.1} parent=5 // pred_check
        _
      $region10: #{tpu_custom_call.1} parent=5 // pred_check_branch
        %317 = sbr.rel (%p314) target = $region12
      $region11: #{tpu_custom_call.1} parent=5 // pred_region
        %s318 = ssub.s32 %s21, 1
        // Predicated region
        $region13: #{tpu_custom_call.1} parent=11 // pred_check
          %p319 = pneg %p68
        $region14: #{tpu_custom_call.1} parent=11 // pred_check_branch
          %321 = sbr.rel (%p319) target = $region16
        $region15: #{tpu_custom_call.1} parent=11 // pred_region
          _
        $region16: #{tpu_custom_call.1} parent=11 // pred_fallthru
          _
        // Predicated region
        $region17: #{tpu_custom_call.1} parent=11 // pred_check
          %p322 = pneg %p89
        $region18: #{tpu_custom_call.1} parent=11 // pred_check_branch
          %324 = sbr.rel (%p322) target = $region20
        $region19: #{tpu_custom_call.1} parent=11 // pred_region
          _
        $region20: #{tpu_custom_call.1} parent=11 // pred_fallthru
          _
        // Predicated region
        $region21: #{tpu_custom_call.1} parent=11 // pred_check
          %p325 = pneg %p110
        $region22: #{tpu_custom_call.1} parent=11 // pred_check_branch
          %327 = sbr.rel (%p325) target = $region24
        $region23: #{tpu_custom_call.1} parent=11 // pred_region
          _
        $region24: #{tpu_custom_call.1} parent=11 // pred_fallthru
          _
        // Predicated region
        $region25: #{tpu_custom_call.1} parent=11 // pred_check
          %p328 = pneg %p131
        $region26: #{tpu_custom_call.1} parent=11 // pred_check_branch
          %330 = sbr.rel (%p328) target = $region28
        $region27: #{tpu_custom_call.1} parent=11 // pred_region
          _
        $region28: #{tpu_custom_call.1} parent=11 // pred_fallthru
          _
        // Predicated region
        $region29: #{tpu_custom_call.1} parent=11 // pred_check
          %p331 = pneg %p152
        $region30: #{tpu_custom_call.1} parent=11 // pred_check_branch
          %333 = sbr.rel (%p331) target = $region32
        $region31: #{tpu_custom_call.1} parent=11 // pred_region
          _
        $region32: #{tpu_custom_call.1} parent=11 // pred_fallthru
          _
        // Predicated region
        $region33: #{tpu_custom_call.1} parent=11 // pred_check
          %p334 = pneg %p173
        $region34: #{tpu_custom_call.1} parent=11 // pred_check_branch
          %336 = sbr.rel (%p334) target = $region36
        $region35: #{tpu_custom_call.1} parent=11 // pred_region
          _
        $region36: #{tpu_custom_call.1} parent=11 // pred_fallthru
          _
        // Predicated region
        $region37: #{tpu_custom_call.1} parent=11 // pred_check
          %p337 = pneg %p194
        $region38: #{tpu_custom_call.1} parent=11 // pred_check_branch
          %339 = sbr.rel (%p337) target = $region40
        $region39: #{tpu_custom_call.1} parent=11 // pred_region
          _
        $region40: #{tpu_custom_call.1} parent=11 // pred_fallthru
          _
        // Predicated region
        $region41: #{tpu_custom_call.1} parent=11 // pred_check
          %p340 = pneg %p215
        $region42: #{tpu_custom_call.1} parent=11 // pred_check_branch
          %342 = sbr.rel (%p340) target = $region44
        $region43: #{tpu_custom_call.1} parent=11 // pred_region
          _
        $region44: #{tpu_custom_call.1} parent=11 // pred_fallthru
          _
        // Predicated region
        $region45: #{tpu_custom_call.1} parent=11 // pred_check
          %p343 = pneg %p236
        $region46: #{tpu_custom_call.1} parent=11 // pred_check_branch
          %345 = sbr.rel (%p343) target = $region48
        $region47: #{tpu_custom_call.1} parent=11 // pred_region
          _
        $region48: #{tpu_custom_call.1} parent=11 // pred_fallthru
          _
        // Predicated region
        $region49: #{tpu_custom_call.1} parent=11 // pred_check
          %p346 = pneg %p257
        $region50: #{tpu_custom_call.1} parent=11 // pred_check_branch
          %348 = sbr.rel (%p346) target = $region52
        $region51: #{tpu_custom_call.1} parent=11 // pred_region
          _
        $region52: #{tpu_custom_call.1} parent=11 // pred_fallthru
          _
        // Predicated region
        $region53: #{tpu_custom_call.1} parent=11 // pred_check
          %p349 = pneg %p278
        $region54: #{tpu_custom_call.1} parent=11 // pred_check_branch
          %351 = sbr.rel (%p349) target = $region56
        $region55: #{tpu_custom_call.1} parent=11 // pred_region
          _
        $region56: #{tpu_custom_call.1} parent=11 // pred_fallthru
          _
      $region12: #{tpu_custom_call.1} parent=5 // pred_fallthru
        _
      %p352 = scmp.lt.s32.totalorder %s21, 2
      // Predicated region
      $region57: #{tpu_custom_call.1} parent=5 // pred_check
        %p353 = pneg %p352
      $region58: #{tpu_custom_call.1} parent=5 // pred_check_branch
        %355 = sbr.rel (%p353) target = $region60
      $region59: #{tpu_custom_call.1} parent=5 // pred_region
        // Predicated region
        $region61: #{tpu_custom_call.1} parent=59 // pred_check
          %p356 = pneg %p41
        $region62: #{tpu_custom_call.1} parent=59 // pred_check_branch
          %358 = sbr.rel (%p356) target = $region64
        $region63: #{tpu_custom_call.1} parent=59 // pred_region
          %p359 = scmp.lt.s32.totalorder %s21, 1
          %s360 = scalar_select %p359, %s21, 1
          %s361 = smul.addr %s360, 2
          %s362 = smul.addr %s361, 4
          %s363 = scalar_lea.vmem %s0, %s362
        $region64: #{tpu_custom_call.1} parent=59 // pred_fallthru
          _
      $region60: #{tpu_custom_call.1} parent=5 // pred_fallthru
        _
      %p364 = scmp.le.s32.totalorder 1, %s21
      %p365 = scmp.lt.s32.totalorder %s21, 3
      %p366 = pnand %p364, %p365
      %p367 = pneg %p366
      // Predicated region
      $region65: #{tpu_custom_call.1} parent=5 // pred_check
        _
      $region66: #{tpu_custom_call.1} parent=5 // pred_check_branch
        %369 = sbr.rel (%p366) target = $region68
      $region67: #{tpu_custom_call.1} parent=5 // pred_region
        %s370 = ssub.s32 %s21, 1
        %p371 = scmp.lt.s32.totalorder %s26, 1
        %s372 = scalar_select %p371, %s26, 1
        %s373 = smul.addr %s372, 2
        %s374 = smul.addr %s373, 4
        %s375 = scalar_lea.vmem %s0, %s374
        %p376 = pneg %p47
        %p377 = pneg %p44
        %p378 = pneg %p68
        %p379 = pneg %p65
        %p380 = pneg %p89
        %p381 = pneg %p86
        %p382 = pneg %p110
        %p383 = pneg %p107
        %p384 = pneg %p131
        %p385 = pneg %p128
        %p386 = pneg %p152
        %p387 = pneg %p149
        %p388 = pneg %p173
        %p389 = pneg %p170
        %p390 = pneg %p194
        %p391 = pneg %p191
        %p392 = pneg %p215
        %p393 = pneg %p212
        %p394 = pneg %p236
        %p395 = pneg %p233
        %p396 = pneg %p257
        %p397 = pneg %p254
        %p398 = pneg %p278
        %p399 = pneg %p275
        %p400 = pneg %p304
        %p401 = pneg %p301
        %s402 = sand.u32 %s291, 1
        %s403 = scalar_lea.sflag [#allocation3], %s402
        %s404 = sand.u32 %s291, 1
        %s405 = smul.addr %s404, 16
        %s406 = scalar_lea.vmem [#allocation2], %s405
        %p407 = scmp.lt.s32.totalorder %s26, 1
        %s408 = scalar_select %p407, %s26, 1
        %s409 = smul.addr %s408, 2
        %s410 = smul.addr %s409, 4
        %s411 = scalar_lea.vmem %s0, %s410
        %v412 = vld [vmem:[%s411] sm:$0xff]
        %v413 = vld [vmem:[%s10] sm:$0x3]
        %v414 = vld [vmem:[%s11] sm:$0x3]
        %v415 = vld [vmem:[%s1] sm:$0xf]
        %417 = vst [vmem:[#allocation1] ss:$2 sm:$0xff] %v412
        %v418 = vld.sshfl [vmem:[#allocation1] sm:$0xff pattern:$0x75316420]
        %v419 = vld.sshfl [vmem:[#allocation1 + $0x8] sm:$0xff pattern:$0x75316420]
        %vm420 = vcmask 31744
        %v422 = vsel %vm420, %v415, 0
        %vm424 = vcmask 1043456
        %v425 = vsel %vm424, %v418, 0
        %v427 = vsel %vm424, %v419, 0
        %429 = vmatpush.msra.mxu0 0.0
        %430 = vmatpush.msra.mxu0 0.0
        %431 = vmatpush.msra.mxu0 0.0
        %432 = vmatpush.msra.mxu0 0.0
        %433 = vmatpush.msra.mxu0 0.0
        %434 = vmatpush.msra.mxu0 0.0
        %435 = vmatpush.msra.mxu0 0.0
        %436 = vmatpush.msra.mxu0 0.0
        %437 = vmatpush.msra.mxu0 0.0
        %438 = vmatpush.msra.mxu0 0.0
        %439 = vmatpush.msra.mxu0 0.0
        %440 = vmatpush.msra.mxu0 0.0
        %441 = vmatpush.msra.mxu0 0.0
        %442 = vmatpush.msra.mxu0 0.0
        %443 = vmatpush.msra.mxu0 0.0
        %444 = vmatpush.msra.mxu0 %v425
        %445 = vmatmul.f32.gmra.mxu0 %v422
        %v446 = vpop.f32.mrf.mxu0
        %v447 = vadd.f32 0.0, %v446
        %448 = vdwg.mxu0
        %449 = vmatpush.msra.mxu0 0.0
        %450 = vmatpush.msra.mxu0 0.0
        %451 = vmatpush.msra.mxu0 0.0
        %452 = vmatpush.msra.mxu0 0.0
        %453 = vmatpush.msra.mxu0 0.0
        %454 = vmatpush.msra.mxu0 0.0
        %455 = vmatpush.msra.mxu0 0.0
        %456 = vmatpush.msra.mxu0 0.0
        %457 = vmatpush.msra.mxu0 0.0
        %458 = vmatpush.msra.mxu0 0.0
        %459 = vmatpush.msra.mxu0 0.0
        %460 = vmatpush.msra.mxu0 0.0
        %461 = vmatpush.msra.mxu0 0.0
        %462 = vmatpush.msra.mxu0 0.0
        %463 = vmatpush.msra.mxu0 0.0
        %464 = vmatpush.msra.mxu0 %v427
        %465 = vmatmul.f32.gmra.mxu0 %v422
        %v466 = vpop.f32.mrf.mxu0
        %v467 = vadd.f32 0.0, %v466
        %468 = vdwg.mxu0
        %v469 = vld [vmem:[%s2] sm:$0xf]
        %v470 = vld [vmem:[%s3] sm:$0xf]
        %472 = vset.pattern.permute.xlu0 0
        %473 = vperm.xlu0 %472, %v469
        %v474 = vpop.permute.xlu0 %473
        %v476 = vmul.f32 %v447, %v474
        %v477 = vmul.f32 %v467, %v474
        %479 = vset.pattern.permute.xlu0 0
        %480 = vperm.xlu0 %479, %v470
        %v481 = vpop.permute.xlu0 %480
        %v483 = vadd.f32 %v476, %v481
        %v484 = vadd.f32 %v477, %v481
        %v485 = vmax.f32 %v483, 0.0
        %v486 = vmax.f32 %v484, 0.0
        %v487 = vld [vmem:[%s4] sm:$0xff]
        %488 = vst [vmem:[#allocation1] ss:$2 sm:$0xff] %v412
        %v489 = vld.sshfl [vmem:[#allocation1] sm:$0xff pattern:$0x75316420]
        %v490 = vld.sshfl [vmem:[#allocation1 + $0x8] sm:$0xff pattern:$0x75316420]
        %491 = vrot.lane.b32.xlu0 %v489, 17
        %v492 = vpop.permute.xlu0 %491
        %493 = vrot.lane.b32.xlu0 %v490, 17
        %v494 = vpop.permute.xlu0 %493
        %vm495 = vcmask 138240
        %v496 = vsel %vm495, %v492, %v494
        %v500 = vsel %vm495, 0.0, %v492
        %v501 = vsel %vm495, %v494, 0.0
        %v503 = vperm.slane %v413, 0
        %v504 = vperm.slane %v413, 1
        %v507 = vmul.f32 %v500, %v503
        %v508 = vmul.f32 %v496, %v504
        %v510 = vperm.slane %v414, 0
        %v511 = vperm.slane %v414, 1
        %512 = vrot.lane.b32.xlu0 %v510, 2
        %v513 = vpop.permute.xlu0 %512
        %514 = vrot.lane.b32.xlu0 %v511, 2
        %v515 = vpop.permute.xlu0 %514
        %vm516 = vcmask 15360
        %v517 = vsel %vm516, %v513, %v515
        %v521 = vmul.f32 %v500, %v513
        %v522 = vmul.f32 %v496, %v517
        %v523 = vmul.f32 %v501, %v515
        %524 = vrot.lane.b32.xlu0 %v503, 16
        %v525 = vpop.permute.xlu0 %524
        %526 = vrot.lane.b32.xlu0 %v504, 16
        %v527 = vpop.permute.xlu0 %526
        %vm528 = vcmask 130048
        %v529 = vsel %vm528, %v525, %v527
        %v533 = vmul.f32 %v500, %v525
        %v534 = vmul.f32 %v496, %v529
        %v535 = vmul.f32 %v501, %v527
        %536 = vrot.lane.b32.xlu0 %v510, 18
        %v537 = vpop.permute.xlu0 %536
        %538 = vrot.lane.b32.xlu0 %v511, 18
        %v539 = vpop.permute.xlu0 %538
        %vm540 = vcmask 146432
        %v541 = vsel %vm540, %v537, %v539
        %v545 = vmul.f32 %v500, %v537
        %v546 = vmul.f32 %v496, %v541
        %v547 = vmul.f32 %v501, %v539
        %548 = vrot.lane.b32.xlu0 %v503, 32
        %v549 = vpop.permute.xlu0 %548
        %550 = vrot.lane.b32.xlu0 %v504, 32
        %v551 = vpop.permute.xlu0 %550
        %vm552 = vcmask 261120
        %v553 = vsel %vm552, %v549, %v551
        %v557 = vmul.f32 %v500, %v549
        %v558 = vmul.f32 %v496, %v553
        %v559 = vmul.f32 %v501, %v551
        %560 = vrot.lane.b32.xlu0 %v510, 34
        %v561 = vpop.permute.xlu0 %560
        %562 = vrot.lane.b32.xlu0 %v511, 34
        %v563 = vpop.permute.xlu0 %562
        %vm564 = vcmask 277504
        %v565 = vsel %vm564, %v561, %v563
        %v569 = vmul.f32 %v500, %v561
        %v570 = vmul.f32 %v496, %v565
        %v571 = vmul.f32 %v501, %v563
        %v574 = vrot.slane %v500, 4
        %v575 = vrot.slane %v496, 4
        %v576 = vrot.slane %v501, 4
        %577 = vrot.lane.b32.xlu0 %v574, 127
        %v578 = vpop.permute.xlu0 %577
        %579 = vrot.lane.b32.xlu0 %v575, 127
        %v580 = vpop.permute.xlu0 %579
        %581 = vrot.lane.b32.xlu0 %v576, 127
        %v582 = vpop.permute.xlu0 %581
        %vm583 = vcmask 1039360
        %v584 = vsel %vm583, %v578, %v580
        %v585 = vsel %vm583, %v580, %v582
        %591 = vrot.lane.b32.xlu0 %v521, 126
        %v592 = vpop.permute.xlu0 %591
        %593 = vrot.lane.b32.xlu0 %v522, 126
        %v594 = vpop.permute.xlu0 %593
        %595 = vrot.lane.b32.xlu0 %v523, 126
        %v596 = vpop.permute.xlu0 %595
        %vm597 = vcmask 1031168
        %v598 = vsel %vm597, %v592, %v594
        %v599 = vsel %vm597, %v594, %v596
        %v605 = vrot.slane %v533, 4
        %v606 = vrot.slane %v534, 4
        %v607 = vrot.slane %v535, 4
        %608 = vrot.lane.b32.xlu0 %v605, 112
        %v609 = vpop.permute.xlu0 %608
        %610 = vrot.lane.b32.xlu0 %v606, 112
        %v611 = vpop.permute.xlu0 %610
        %612 = vrot.lane.b32.xlu0 %v607, 112
        %v613 = vpop.permute.xlu0 %612
        %vm614 = vcmask 916480
        %v615 = vsel %vm614, %v609, %v611
        %v616 = vsel %vm614, %v611, %v613
        %619 = vrot.lane.b32.xlu0 %v500, 111
        %v620 = vpop.permute.xlu0 %619
        %621 = vrot.lane.b32.xlu0 %v496, 111
        %v622 = vpop.permute.xlu0 %621
        %623 = vrot.lane.b32.xlu0 %v501, 111
        %v624 = vpop.permute.xlu0 %623
        %vm625 = vcmask 908288
        %v626 = vsel %vm625, %v620, %v622
        %v627 = vsel %vm625, %v622, %v624
        %v633 = vrot.slane %v545, 4
        %v634 = vrot.slane %v546, 4
        %v635 = vrot.slane %v547, 4
        %636 = vrot.lane.b32.xlu0 %v633, 110
        %v637 = vpop.permute.xlu0 %636
        %638 = vrot.lane.b32.xlu0 %v634, 110
        %v639 = vpop.permute.xlu0 %638
        %640 = vrot.lane.b32.xlu0 %v635, 110
        %v641 = vpop.permute.xlu0 %640
        %vm642 = vcmask 900096
        %v643 = vsel %vm642, %v637, %v639
        %v644 = vsel %vm642, %v639, %v641
        %650 = vrot.lane.b32.xlu0 %v557, 96
        %v651 = vpop.permute.xlu0 %650
        %652 = vrot.lane.b32.xlu0 %v558, 96
        %v653 = vpop.permute.xlu0 %652
        %654 = vrot.lane.b32.xlu0 %v559, 96
        %v655 = vpop.permute.xlu0 %654
        %vm656 = vcmask 785408
        %v657 = vsel %vm656, %v651, %v653
        %v658 = vsel %vm656, %v653, %v655
        %661 = vrot.lane.b32.xlu0 %v574, 95
        %v662 = vpop.permute.xlu0 %661
        %663 = vrot.lane.b32.xlu0 %v575, 95
        %v664 = vpop.permute.xlu0 %663
        %665 = vrot.lane.b32.xlu0 %v576, 95
        %v666 = vpop.permute.xlu0 %665
        %vm667 = vcmask 777216
        %v668 = vsel %vm667, %v662, %v664
        %v669 = vsel %vm667, %v664, %v666
        %675 = vrot.lane.b32.xlu0 %v569, 94
        %v676 = vpop.permute.xlu0 %675
        %677 = vrot.lane.b32.xlu0 %v570, 94
        %v678 = vpop.permute.xlu0 %677
        %679 = vrot.lane.b32.xlu0 %v571, 94
        %v680 = vpop.permute.xlu0 %679
        %vm681 = vcmask 769024
        %v682 = vsel %vm681, %v676, %v678
        %v683 = vsel %vm681, %v678, %v680
        %v684 = vsel %vm424, %v507, %v584
        %v685 = vsel %vm424, %v508, %v585
        %v686 = vsel %vm424, %v598, %v615
        %v687 = vsel %vm424, %v599, %v616
        %v688 = vsel %vm424, %v626, %v643
        %v689 = vsel %vm424, %v627, %v644
        %v690 = vsel %vm424, %v657, %v668
        %v691 = vsel %vm424, %v658, %v669
        %vm692 = vcmask 293888
        %v694 = vsel %vm692, %v487, 0
        %v696 = vsel %vm424, %v682, 0
        %v698 = vsel %vm424, %v683, 0
        %700 = vmatpush.msra.mxu0 0.0
        %701 = vmatpush.msra.mxu0 0.0
        %702 = vmatpush.msra.mxu0 0.0
        %703 = vmatpush.msra.mxu0 0.0
        %704 = vmatpush.msra.mxu0 0.0
        %705 = vmatpush.msra.mxu0 0.0
        %706 = vmatpush.msra.mxu0 0.0
        %707 = vmatpush.msra.mxu0 0.0
        %708 = vmatpush.msra.mxu0 0.0
        %709 = vmatpush.msra.mxu0 0.0
        %710 = vmatpush.msra.mxu0 0.0
        %711 = vmatpush.msra.mxu0 %v696
        %712 = vmatpush.msra.mxu0 %v690
        %713 = vmatpush.msra.mxu0 %v688
        %714 = vmatpush.msra.mxu0 %v686
        %715 = vmatpush.msra.mxu0 %v684
        %716 = vmatmul.f32.gmra.mxu0 %v694
        %v717 = vpop.f32.mrf.mxu0
        %v718 = vadd.f32 0.0, %v717
        %719 = vdwg.mxu0
        %720 = vmatpush.msra.mxu0 0.0
        %721 = vmatpush.msra.mxu0 0.0
        %722 = vmatpush.msra.mxu0 0.0
        %723 = vmatpush.msra.mxu0 0.0
        %724 = vmatpush.msra.mxu0 0.0
        %725 = vmatpush.msra.mxu0 0.0
        %726 = vmatpush.msra.mxu0 0.0
        %727 = vmatpush.msra.mxu0 0.0
        %728 = vmatpush.msra.mxu0 0.0
        %729 = vmatpush.msra.mxu0 0.0
        %730 = vmatpush.msra.mxu0 0.0
        %731 = vmatpush.msra.mxu0 %v698
        %732 = vmatpush.msra.mxu0 %v691
        %733 = vmatpush.msra.mxu0 %v689
        %734 = vmatpush.msra.mxu0 %v687
        %735 = vmatpush.msra.mxu0 %v685
        %736 = vmatmul.f32.gmra.mxu0 %v694
        %v737 = vpop.f32.mrf.mxu0
        %v738 = vadd.f32 0.0, %v737
        %739 = vdwg.mxu0
        %v740 = vld [vmem:[%s5] sm:$0xff]
        %v741 = vld [vmem:[%s6] sm:$0xff]
        %743 = vset.pattern.permute.xlu0 0
        %744 = vperm.xlu0 %743, %v740
        %v745 = vpop.permute.xlu0 %744
        %v747 = vmul.f32 %v718, %v745
        %v748 = vmul.f32 %v738, %v745
        %750 = vset.pattern.permute.xlu0 0
        %751 = vperm.xlu0 %750, %v741
        %v752 = vpop.permute.xlu0 %751
        %v754 = vadd.f32 %v747, %v752
        %v755 = vadd.f32 %v748, %v752
        %v756 = vmax.f32 %v754, 0.0
        %v757 = vmax.f32 %v755, 0.0
        %v758 = vld [vmem:[%s7] sm:$0xff]
        %761 = vrot.lane.b32.xlu0 %v756, 17
        %v762 = vpop.permute.xlu0 %761
        %763 = vrot.lane.b32.xlu0 %v757, 17
        %v764 = vpop.permute.xlu0 %763
        %v765 = vsel %vm495, %v762, %v764
        %v769 = vsel %vm495, 0.0, %v762
        %v770 = vsel %vm495, %v764, 0.0
        %v771 = vmul.f32 %v769, %v503
        %v772 = vmul.f32 %v765, %v504
        %v773 = vmul.f32 %v769, %v513
        %v774 = vmul.f32 %v765, %v517
        %v775 = vmul.f32 %v770, %v515
        %v776 = vmul.f32 %v769, %v525
        %v777 = vmul.f32 %v765, %v529
        %v778 = vmul.f32 %v770, %v527
        %v779 = vmul.f32 %v769, %v537
        %v780 = vmul.f32 %v765, %v541
        %v781 = vmul.f32 %v770, %v539
        %v782 = vmul.f32 %v769, %v549
        %v783 = vmul.f32 %v765, %v553
        %v784 = vmul.f32 %v770, %v551
        %v785 = vmul.f32 %v769, %v561
        %v786 = vmul.f32 %v765, %v565
        %v787 = vmul.f32 %v770, %v563
        %790 = vrot.lane.b32.xlu0 %v769, 127
        %v791 = vpop.permute.xlu0 %790
        %792 = vrot.lane.b32.xlu0 %v765, 127
        %v793 = vpop.permute.xlu0 %792
        %794 = vrot.lane.b32.xlu0 %v770, 127
        %v795 = vpop.permute.xlu0 %794
        %v796 = vsel %vm583, %v791, %v793
        %v797 = vsel %vm583, %v793, %v795
        %803 = vrot.lane.b32.xlu0 %v773, 126
        %v804 = vpop.permute.xlu0 %803
        %805 = vrot.lane.b32.xlu0 %v774, 126
        %v806 = vpop.permute.xlu0 %805
        %807 = vrot.lane.b32.xlu0 %v775, 126
        %v808 = vpop.permute.xlu0 %807
        %v809 = vsel %vm597, %v804, %v806
        %v810 = vsel %vm597, %v806, %v808
        %816 = vrot.lane.b32.xlu0 %v776, 112
        %v817 = vpop.permute.xlu0 %816
        %818 = vrot.lane.b32.xlu0 %v777, 112
        %v819 = vpop.permute.xlu0 %818
        %820 = vrot.lane.b32.xlu0 %v778, 112
        %v821 = vpop.permute.xlu0 %820
        %v822 = vsel %vm614, %v817, %v819
        %v823 = vsel %vm614, %v819, %v821
        %826 = vrot.lane.b32.xlu0 %v769, 111
        %v827 = vpop.permute.xlu0 %826
        %828 = vrot.lane.b32.xlu0 %v765, 111
        %v829 = vpop.permute.xlu0 %828
        %830 = vrot.lane.b32.xlu0 %v770, 111
        %v831 = vpop.permute.xlu0 %830
        %v832 = vsel %vm625, %v827, %v829
        %v833 = vsel %vm625, %v829, %v831
        %839 = vrot.lane.b32.xlu0 %v779, 110
        %v840 = vpop.permute.xlu0 %839
        %841 = vrot.lane.b32.xlu0 %v780, 110
        %v842 = vpop.permute.xlu0 %841
        %843 = vrot.lane.b32.xlu0 %v781, 110
        %v844 = vpop.permute.xlu0 %843
        %v845 = vsel %vm642, %v840, %v842
        %v846 = vsel %vm642, %v842, %v844
        %852 = vrot.lane.b32.xlu0 %v782, 96
        %v853 = vpop.permute.xlu0 %852
        %854 = vrot.lane.b32.xlu0 %v783, 96
        %v855 = vpop.permute.xlu0 %854
        %856 = vrot.lane.b32.xlu0 %v784, 96
        %v857 = vpop.permute.xlu0 %856
        %v858 = vsel %vm656, %v853, %v855
        %v859 = vsel %vm656, %v855, %v857
        %862 = vrot.lane.b32.xlu0 %v769, 95
        %v863 = vpop.permute.xlu0 %862
        %864 = vrot.lane.b32.xlu0 %v765, 95
        %v865 = vpop.permute.xlu0 %864
        %866 = vrot.lane.b32.xlu0 %v770, 95
        %v867 = vpop.permute.xlu0 %866
        %v868 = vsel %vm667, %v863, %v865
        %v869 = vsel %vm667, %v865, %v867
        %875 = vrot.lane.b32.xlu0 %v785, 94
        %v876 = vpop.permute.xlu0 %875
        %877 = vrot.lane.b32.xlu0 %v786, 94
        %v878 = vpop.permute.xlu0 %877
        %879 = vrot.lane.b32.xlu0 %v787, 94
        %v880 = vpop.permute.xlu0 %879
        %v881 = vsel %vm681, %v876, %v878
        %v882 = vsel %vm681, %v878, %v880
        %vm885 = vcmask 588800
        %v887 = vsel %vm885, %v758, 0
        %889 = vmatpush.msra.mxu0 0.0
        %890 = vmatpush.msra.mxu0 0.0
        %891 = vmatpush.msra.mxu0 0.0
        %892 = vmatpush.msra.mxu0 0.0
        %893 = vmatpush.msra.mxu0 0.0
        %894 = vmatpush.msra.mxu0 0.0
        %895 = vmatpush.msra.mxu0 0.0
        %896 = vmatpush.msra.mxu0 %v881
        %897 = vmatpush.msra.mxu0 %v868
        %898 = vmatpush.msra.mxu0 %v858
        %899 = vmatpush.msra.mxu0 %v845
        %900 = vmatpush.msra.mxu0 %v832
        %901 = vmatpush.msra.mxu0 %v822
        %902 = vmatpush.msra.mxu0 %v809
        %903 = vmatpush.msra.mxu0 %v796
        %904 = vmatpush.msra.mxu0 %v771
        %905 = vmatmul.f32.gmra.mxu0 %v887
        %v906 = vpop.f32.mrf.mxu0
        %v907 = vadd.f32 0.0, %v906
        %908 = vdwg.mxu0
        %909 = vmatpush.msra.mxu0 0.0
        %910 = vmatpush.msra.mxu0 0.0
        %911 = vmatpush.msra.mxu0 0.0
        %912 = vmatpush.msra.mxu0 0.0
        %913 = vmatpush.msra.mxu0 0.0
        %914 = vmatpush.msra.mxu0 0.0
        %915 = vmatpush.msra.mxu0 0.0
        %916 = vmatpush.msra.mxu0 %v882
        %917 = vmatpush.msra.mxu0 %v869
        %918 = vmatpush.msra.mxu0 %v859
        %919 = vmatpush.msra.mxu0 %v846
        %920 = vmatpush.msra.mxu0 %v833
        %921 = vmatpush.msra.mxu0 %v823
        %922 = vmatpush.msra.mxu0 %v810
        %923 = vmatpush.msra.mxu0 %v797
        %924 = vmatpush.msra.mxu0 %v772
        %925 = vmatmul.f32.gmra.mxu0 %v887
        %v926 = vpop.f32.mrf.mxu0
        %v927 = vadd.f32 0.0, %v926
        %928 = vdwg.mxu0
        %v929 = vld [vmem:[%s8] sm:$0xff]
        %v930 = vld [vmem:[%s9] sm:$0xff]
        %932 = vset.pattern.permute.xlu0 0
        %933 = vperm.xlu0 %932, %v929
        %v934 = vpop.permute.xlu0 %933
        %v936 = vmul.f32 %v907, %v934
        %v937 = vmul.f32 %v927, %v934
        %939 = vset.pattern.permute.xlu0 0
        %940 = vperm.xlu0 %939, %v930
        %v941 = vpop.permute.xlu0 %940
        %v943 = vadd.f32 %v936, %v941
        %v944 = vadd.f32 %v937, %v941
        %v945 = vmax.f32 %v943, 0.0
        %v946 = vmax.f32 %v944, 0.0
        %947 = vst [vmem:[#allocation1] ss:$2 sm:$0xff] %v412
        %v948 = vld.sshfl [vmem:[#allocation1] sm:$0xff pattern:$0x75316420]
        %v949 = vld.sshfl [vmem:[#allocation1 + $0x8] sm:$0xff pattern:$0x75316420]
        %v954 = vrot.slane %v485, 4
        %v955 = vrot.slane %v486, 4
        %v958 = vsel %vm424, %v948, %v954
        %v959 = vsel %vm424, %v949, %v955
        %v960 = vadd.f32 %v945, %v958
        %v961 = vadd.f32 %v946, %v959
        %v962 = vmax.f32 %v960, 0.0
        %v963 = vmax.f32 %v961, 0.0
        %964 = vst [vmem:[%s406] sm:$0xff] %v962
        %965 = vst [vmem:[%s406 + $0x8] sm:$0xff] %v963
        %s966 = sand.u32 %s291, 1
        %s967 = scalar_lea.sflag [#allocation3], %s966
        %s968 = sand.u32 %s291, 1
        %s969 = smul.addr %s968, 16
        %s970 = scalar_lea.vmem [#allocation2], %s969
        // Predicated region
        $region69: #{tpu_custom_call.1} parent=67 // pred_check
          %p971 = pneg %p301
        $region70: #{tpu_custom_call.1} parent=67 // pred_check_branch
          %973 = sbr.rel (%p971) target = $region72
        $region71: #{tpu_custom_call.1} parent=67 // pred_region
          %975 = vsyncadd %s967, 0
          %s976 = smul.addr %s26, 2
          %s977 = smul.addr %s976, 8
          %s978 = scalar_lea.hbm %s12, %s977
          %s980 = sshll.u32 %s970, 4
          %s981 = int_to_ptr.vmem [resolvable:$true] %s980
          %s982 = sshll.u32 %s978, 4
          %s983 = int_to_ptr.hbm [resolvable:$true] %s982
          %985 = dma.vmem_to_hbm [thread:$0]  %s981, 256, %s983, %s967
        $region72: #{tpu_custom_call.1} parent=67 // pred_fallthru
          _
      $region68: #{tpu_custom_call.1} parent=5 // pred_fallthru
        _
      %p986 = scmp.le.s32.totalorder 2, %s21
      // Predicated region
      $region73: #{tpu_custom_call.1} parent=5 // pred_check
        %p987 = pneg %p986
      $region74: #{tpu_custom_call.1} parent=5 // pred_check_branch
        %989 = sbr.rel (%p987) target = $region76
      $region75: #{tpu_custom_call.1} parent=5 // pred_region
        %s990 = ssub.s32 %s21, 2
        // Predicated region
        $region77: #{tpu_custom_call.1} parent=75 // pred_check
          %p991 = pneg %p307
        $region78: #{tpu_custom_call.1} parent=75 // pred_check_branch
          %993 = sbr.rel (%p991) target = $region80
        $region79: #{tpu_custom_call.1} parent=75 // pred_region
          %s994 = sand.u32 %s292, 1
          %s995 = scalar_lea.sflag [#allocation3], %s994
          %s996 = sand.u32 %s292, 1
          %s997 = smul.addr %s996, 16
          %s998 = scalar_lea.vmem [#allocation2], %s997
          %1000 = dma.done %s995, 256
        $region80: #{tpu_custom_call.1} parent=75 // pred_fallthru
          _
      $region76: #{tpu_custom_call.1} parent=5 // pred_fallthru
        _
    $region6: #{tpu_custom_call.1} parent=1 // loop_footer
      %s25 = sadd.s32 1, %s21
    $region7: #{tpu_custom_call.1} parent=1 // loop_footer_branch
      %20 = sbr.rel target = $region3
    $region8: #{tpu_custom_call.1} parent=1 // loop_exit
      _
    %1001 = vsyncpa [#allocation3], 1
    %s1002 = scalar_lea.sflag [#allocation3], 1
    %1003 = vsyncpa %s1002, 1

</llo_original>
